<compile_context>
chip_gen: v6e
topology: v6e:2x2x1
jax: 0.10.0
libtpu: 0.0.40
codegen_flags: <defaults>
</compile_context>

<pallas_src>
import jax
import jax.numpy as jnp
import numpy as np
from jax.experimental import pallas as pl
from jax.experimental.pallas import tpu as pltpu

OUT_LANES = 128  # lane-dense output slab width


# ----------------------------- Pallas kernel -------------------------------
def ggnn_kernel(x_ref, a_ref, w4_ref, wi_ref, brz_ref, bin_ref, bhn_ref,
                fcw_ref, fcb_ref, o_ref):
    N, H = x_ref.shape
    num_layers = w4_ref.shape[0]

    # Hoist layer-invariant loads and bias broadcasts out of the unrolled loop
    # (JAX does not CSE broadcast_in_dim / reloads across the unroll).
    a_bf = a_ref[...]                                        # [N, N]  bf16
    wi_cat = wi_ref[...]                                     # [H, 3H] bf16 (r|z|n)
    b_rz = jnp.broadcast_to(brz_ref[...], (N, 2 * H))        # [N, 2H] f32
    b_in = jnp.broadcast_to(bin_ref[...], (N, H))            # [N, H]  f32
    b_hn = jnp.broadcast_to(bhn_ref[...], (N, H))            # [N, H]  f32
    fcw = fcw_ref[...]                                       # [1, H]  f32

    h = x_ref[...]  # f32 [N, H]; carried as a value through the static unroll

    for l in range(num_layers):  # small static layer count -> unrolled
        h_bf = h.astype(jnp.bfloat16)

        # Fused [m | gh] GEMM: one MXU pass over [H, 4H]
        # (columns 0:H = W_l message weights, H:4H = Wh gate weights r|z|n).
        # At H=32 the output is exactly 128 lanes -> fully lane-dense vregs.
        mgh = jnp.dot(h_bf, w4_ref[l], preferred_element_type=jnp.float32)
        m = mgh[:, :H]          # [N, H]  message
        gh = mgh[:, H:]         # [N, 3H] h-side gate pre-activations (r|z|n)

        # scatter-add aggregation as dense adjacency matmul
        agg = jnp.dot(a_bf, m.astype(jnp.bfloat16),
                      preferred_element_type=jnp.float32)

        # fused GRU input-gate GEMM: [N, 3H] (r | z | n)
        gi = jnp.dot(agg.astype(jnp.bfloat16), wi_cat,
                     preferred_element_type=jnp.float32)

        rz = jax.nn.sigmoid(gi[:, :2 * H] + gh[:, :2 * H] + b_rz)
        r = rz[:, :H]
        z = rz[:, H:]
        n = jnp.tanh(gi[:, 2 * H:] + b_in + r * (gh[:, 2 * H:] + b_hn))

        h = (1.0 - z) * n + z * h

    # fc(hidden_dim -> 1) as VPU multiply + lane reduction (no 1-wide matmul),
    # then clamp(0.01, 1.0). Emit a lane-dense [N, OUT_LANES] slab; the wrapper
    # slices column 0.
    val = jnp.sum(h * fcw, axis=-1, keepdims=True) + fcb_ref[0, 0]
    val = jnp.clip(val, 0.01, 1.0)
    o_ref[...] = jnp.broadcast_to(val, o_ref.shape)


# ----------------------------- host-side glue -------------------------------
def _prep_params(params):
    """Re-layout raw parameters for the fused kernel."""
    H = params["W"].shape[-1]
    L = params["W"].shape[0]
    wh_cat = jnp.concatenate(
        [params["Wh"][0], params["Wh"][1], params["Wh"][2]], axis=1)  # [H, 3H]
    # Per-layer fused RHS: [W_l | Wh_r | Wh_z | Wh_n] -> [L, H, 4H]
    w4 = jnp.concatenate(
        [params["W"], jnp.broadcast_to(wh_cat[None], (L, H, 3 * H))],
        axis=2).astype(jnp.bfloat16)
    return {
        "W4": w4,                                                    # [L, H, 4H] bf16
        "Wi_cat": jnp.concatenate(
            [params["Wi"][0], params["Wi"][1], params["Wi"][2]],
            axis=1).astype(jnp.bfloat16),                            # [H, 3H] bf16
        "b_rz": jnp.concatenate(
            [params["bi"][0] + params["bh"][0],
             params["bi"][1] + params["bh"][1]], axis=1),            # [1, 2H] f32
        "b_in": params["bi"][2],                                     # [1, H]  f32
        "b_hn": params["bh"][2],                                     # [1, H]  f32
        "fcw_row": params["fcw"].reshape(1, H).astype(jnp.float32),  # [1, H]  f32
        "fcb": params["fcb"].reshape(1, 1).astype(jnp.float32),      # [1, 1]  f32
    }


def _build_inputs(x, edge_index, H):
    """Zero-pad features to hidden_dim and build the dense adjacency."""
    N, F = x.shape
    x_pad = jnp.concatenate(
        [x.astype(jnp.float32), jnp.zeros((N, H - F), jnp.float32)], axis=1)
    src, dst = edge_index[0], edge_index[1]
    # A[dst, src] += 1  (replaces scatter_add over edges). Edge counts are small
    # integers -> exact in bf16 (for counts < 256).
    A = jnp.zeros((N, N), jnp.float32).at[dst, src].add(1.0)
    return x_pad, A


def ggnn_forward(x, edge_index, params):
    """x: [N, F] node features, edge_index: [2, E] int32 (row0=src, row1=dst)."""
    N, F = x.shape
    H = params["W"].shape[-1]
    assert F <= H, "num_features must be <= hidden_dim (GatedGraphConv contract)"

    p = _prep_params(params)
    x_pad, A = _build_inputs(x, edge_index, H)
    A_bf = A.astype(jnp.bfloat16)

    vmem = pl.BlockSpec(memory_space=pltpu.MemorySpace.VMEM)
    smem = pl.BlockSpec(memory_space=pltpu.MemorySpace.SMEM)

    out = pl.pallas_call(
        ggnn_kernel,
        out_shape=jax.ShapeDtypeStruct((N, OUT_LANES), jnp.float32),
        in_specs=[vmem,   # x_pad        [N, H]     f32
                  vmem,   # A            [N, N]     bf16
                  vmem,   # W4           [L, H, 4H] bf16
                  vmem,   # Wi_cat       [H, 3H]    bf16
                  vmem,   # b_rz         [1, 2H]    f32
                  vmem,   # b_in         [1, H]     f32
                  vmem,   # b_hn         [1, H]     f32
                  vmem,   # fcw_row      [1, H]     f32
                  smem],  # fcb          [1, 1]     f32 scalar
        out_specs=vmem,
        compiler_params=pltpu.CompilerParams(
            # Raise the scoped VMEM cap (v5e default is 16 MiB); for large N the
            # adjacency must be row-tile streamed instead (see TODO at top).
            vmem_limit_bytes=32 * 1024 * 1024),
    )(x_pad, A_bf, p["W4"], p["Wi_cat"],
      p["b_rz"], p["b_in"], p["b_hn"], p["fcw_row"], p["fcb"])

    # lane-dense slab -> [N, 1]
    return out[:, :1]


# --------------------------- pure-JAX references ----------------------------
def ggnn_reference_f32(x, edge_index, params):
    """Exact f32 semantics of the PyTorch module (GatedGraphConv + fc + clamp)."""
    N, F = x.shape
    H = params["W"].shape[-1]
    L = params["W"].shape[0]
    h, A = _build_inputs(x, edge_index, H)
    for l in range(L):
        m = h @ params["W"][l]
        agg = A @ m
        r = jax.nn.sigmoid(agg @ params["Wi"][0] + params["bi"][0]
                           + h @ params["Wh"][0] + params["bh"][0])
        z = jax.nn.sigmoid(agg @ params["Wi"][1] + params["bi"][1]
                           + h @ params["Wh"][1] + params["bh"][1])
        n = jnp.tanh(agg @ params["Wi"][2] + params["bi"][2]
                     + r * (h @ params["Wh"][2] + params["bh"][2]))
        h = (1.0 - z) * n + z * h
    out = h @ params["fcw"] + params["fcb"]
    return jnp.clip(out, 0.01, 1.0)


def ggnn_reference_matched(x, edge_index, params):
    """Mirror of the kernel's compute (bf16 dot inputs, f32 accumulation)."""
    N, F = x.shape
    H = params["W"].shape[-1]
    L = params["W"].shape[0]
    p = _prep_params(params)
    h, A = _build_inputs(x, edge_index, H)
    A_bf = A.astype(jnp.bfloat16)
    for l in range(L):
        h_bf = h.astype(jnp.bfloat16)
        mgh = jnp.dot(h_bf, p["W4"][l], preferred_element_type=jnp.float32)
        m, gh = mgh[:, :H], mgh[:, H:]
        agg = jnp.dot(A_bf, m.astype(jnp.bfloat16),
                      preferred_element_type=jnp.float32)
        gi = jnp.dot(agg.astype(jnp.bfloat16), p["Wi_cat"],
                     preferred_element_type=jnp.float32)
        rz = jax.nn.sigmoid(gi[:, :2 * H] + gh[:, :2 * H] + p["b_rz"])
        r, z = rz[:, :H], rz[:, H:]
        n = jnp.tanh(gi[:, 2 * H:] + p["b_in"] + r * (gh[:, 2 * H:] + p["b_hn"]))
        h = (1.0 - z) * n + z * h
    val = jnp.sum(h * p["fcw_row"], axis=-1, keepdims=True) + p["fcb"][0, 0]
    return jnp.clip(val, 0.01, 1.0)


# --------------------------- deterministic params --------------------------
def init_params(key, hidden_dim, num_layers):
    H = hidden_dim
    ks = jax.random.split(key, 8)
    bnd = 1.0 / np.sqrt(H)                      # torch_geometric / GRUCell bound
    xav = np.sqrt(6.0 / (H + 1))                # xavier_uniform for fc [1, H]
    return {
        "W":  jax.random.uniform(ks[0], (num_layers, H, H), jnp.float32, -bnd, bnd),
        "Wi": jax.random.uniform(ks[1], (3, H, H), jnp.float32, -bnd, bnd),
        "Wh": jax.random.uniform(ks[2], (3, H, H), jnp.float32, -bnd, bnd),
        "bi": jax.random.uniform(ks[3], (3, 1, H), jnp.float32, -bnd, bnd),
        "bh": jax.random.uniform(ks[4], (3, 1, H), jnp.float32, -bnd, bnd),
        "fcw": jax.random.uniform(ks[5], (H, 1), jnp.float32, -xav, xav),
        "fcb": jax.random.uniform(ks[6], (1, 1), jnp.float32, -bnd, bnd),
    }


if __name__ == "__main__":
    N, F, H, L, E = 16, 4, 32, 3, 40   # nodes, num_features, hidden_dim, layers, edges

    key = jax.random.PRNGKey(0)
    k_x, k_e, k_p = jax.random.split(key, 3)
    x = jax.random.normal(k_x, (N, F), jnp.float32)
    edge_index = jax.random.randint(k_e, (2, E), 0, N, jnp.int32)
    params = init_params(k_p, H, L)

    out = ggnn_forward(x, edge_index, params)
    jax.block_until_ready(out)
    assert out.shape == (N, 1)

    # Tight check: kernel vs a JAX reference using the same bf16/f32 compute.
    ref_matched = ggnn_reference_matched(x, edge_index, params)
    np.testing.assert_allclose(np.asarray(out), np.asarray(ref_matched),
                               rtol=2e-3, atol=2e-3)

    # Semantics check: kernel vs the full-f32 reference of the PyTorch module
    # (looser tolerance accounts for bf16 dot inputs; accumulation stays f32).
    ref_f32 = ggnn_reference_f32(x, edge_index, params)
    np.testing.assert_allclose(np.asarray(out), np.asarray(ref_f32),
                               rtol=5e-2, atol=5e-2)

    print("KERNEL_OK")
</pallas_src>

<mosaic_0001>
module attributes {stable_mosaic.version = 11 : i64} {
  func.func @ggnn_kernel(%arg0: memref<16x32xf32, #tpu.memory_space<vmem>>, %arg1: memref<16x16xbf16, #tpu.memory_space<vmem>>, %arg2: memref<3x32x128xbf16, #tpu.memory_space<vmem>>, %arg3: memref<32x96xbf16, #tpu.memory_space<vmem>>, %arg4: memref<1x64xf32, #tpu.memory_space<vmem>>, %arg5: memref<1x32xf32, #tpu.memory_space<vmem>>, %arg6: memref<1x32xf32, #tpu.memory_space<vmem>>, %arg7: memref<1x32xf32, #tpu.memory_space<vmem>>, %arg8: memref<1x1xf32, #tpu.memory_space<smem>>, %arg9: memref<16x128xf32, #tpu.memory_space<vmem>>) attributes {dimension_semantics = [], scalar_prefetch = 0 : i64, scratch_operands = 0 : i64, tpu.core_type = #tpu.core_type<tc>} {
    %c0 = arith.constant 0 : index
    %c0_0 = arith.constant 0 : index
    %0 = vector.load %arg1[%c0, %c0_0] : memref<16x16xbf16, #tpu.memory_space<vmem>>, vector<16x16xbf16>
    %c0_1 = arith.constant 0 : index
    %c0_2 = arith.constant 0 : index
    %1 = vector.load %arg3[%c0_1, %c0_2] : memref<32x96xbf16, #tpu.memory_space<vmem>>, vector<32x96xbf16>
    %c0_3 = arith.constant 0 : index
    %c0_4 = arith.constant 0 : index
    %2 = vector.load %arg4[%c0_3, %c0_4] : memref<1x64xf32, #tpu.memory_space<vmem>>, vector<1x64xf32>
    %3 = vector.shape_cast %2 : vector<1x64xf32> to vector<1x64xf32>
    %4 = vector.broadcast %3 : vector<1x64xf32> to vector<16x64xf32>
    %c0_5 = arith.constant 0 : index
    %c0_6 = arith.constant 0 : index
    %5 = vector.load %arg5[%c0_5, %c0_6] : memref<1x32xf32, #tpu.memory_space<vmem>>, vector<1x32xf32>
    %6 = vector.shape_cast %5 : vector<1x32xf32> to vector<1x32xf32>
    %7 = vector.broadcast %6 : vector<1x32xf32> to vector<16x32xf32>
    %c0_7 = arith.constant 0 : index
    %c0_8 = arith.constant 0 : index
    %8 = vector.load %arg6[%c0_7, %c0_8] : memref<1x32xf32, #tpu.memory_space<vmem>>, vector<1x32xf32>
    %9 = vector.shape_cast %8 : vector<1x32xf32> to vector<1x32xf32>
    %10 = vector.broadcast %9 : vector<1x32xf32> to vector<16x32xf32>
    %c0_9 = arith.constant 0 : index
    %c0_10 = arith.constant 0 : index
    %11 = vector.load %arg7[%c0_9, %c0_10] : memref<1x32xf32, #tpu.memory_space<vmem>>, vector<1x32xf32>
    %c0_11 = arith.constant 0 : index
    %c0_12 = arith.constant 0 : index
    %12 = vector.load %arg0[%c0_11, %c0_12] : memref<16x32xf32, #tpu.memory_space<vmem>>, vector<16x32xf32>
    %13 = arith.truncf %12 : vector<16x32xf32> to vector<16x32xbf16>
    %c0_13 = arith.constant 0 : index
    %c0_14 = arith.constant 0 : index
    %c0_15 = arith.constant 0 : index
    %14 = vector.load %arg2[%c0_13, %c0_14, %c0_15] : memref<3x32x128xbf16, #tpu.memory_space<vmem>>, vector<1x32x128xbf16>
    %15 = vector.shape_cast %14 : vector<1x32x128xbf16> to vector<32x128xbf16>
    %cst = arith.constant dense<0.000000e+00> : vector<16x128xf32>
    %16 = tpu.matmul %13, %15, %cst {dimension_numbers = #tpu.dot_dimension_numbers<[1], [0], [0], [1], [0, 0, 1, 1], [], []>} : vector<16x32xbf16>, vector<32x128xbf16>, vector<16x128xf32> -> vector<16x128xf32>
    %17 = vector.extract_strided_slice %16 {offsets = [0, 0], sizes = [16, 32], strides = [1, 1]} : vector<16x128xf32> to vector<16x32xf32>
    %18 = vector.extract_strided_slice %16 {offsets = [0, 32], sizes = [16, 96], strides = [1, 1]} : vector<16x128xf32> to vector<16x96xf32>
    %19 = arith.truncf %17 : vector<16x32xf32> to vector<16x32xbf16>
    %cst_16 = arith.constant dense<0.000000e+00> : vector<16x32xf32>
    %20 = tpu.matmul %0, %19, %cst_16 {dimension_numbers = #tpu.dot_dimension_numbers<[1], [0], [0], [1], [0, 0, 1, 1], [], []>} : vector<16x16xbf16>, vector<16x32xbf16>, vector<16x32xf32> -> vector<16x32xf32>
    %21 = arith.truncf %20 : vector<16x32xf32> to vector<16x32xbf16>
    %cst_17 = arith.constant dense<0.000000e+00> : vector<16x96xf32>
    %22 = tpu.matmul %21, %1, %cst_17 {dimension_numbers = #tpu.dot_dimension_numbers<[1], [0], [0], [1], [0, 0, 1, 1], [], []>} : vector<16x32xbf16>, vector<32x96xbf16>, vector<16x96xf32> -> vector<16x96xf32>
    %23 = vector.extract_strided_slice %22 {offsets = [0, 0], sizes = [16, 64], strides = [1, 1]} : vector<16x96xf32> to vector<16x64xf32>
    %24 = vector.extract_strided_slice %18 {offsets = [0, 0], sizes = [16, 64], strides = [1, 1]} : vector<16x96xf32> to vector<16x64xf32>
    %25 = arith.addf %23, %24 : vector<16x64xf32>
    %26 = arith.addf %25, %4 : vector<16x64xf32>
    %27 = arith.negf %26 : vector<16x64xf32>
    %28 = math.exp %27 : vector<16x64xf32>
    %cst_18 = arith.constant 1.000000e+00 : f32
    %29 = vector.broadcast %cst_18 : f32 to vector<16x64xf32>
    %30 = arith.addf %29, %28 : vector<16x64xf32>
    %31 = arith.divf %29, %30 : vector<16x64xf32>
    %32 = vector.extract_strided_slice %31 {offsets = [0, 0], sizes = [16, 32], strides = [1, 1]} : vector<16x64xf32> to vector<16x32xf32>
    %33 = vector.extract_strided_slice %31 {offsets = [0, 32], sizes = [16, 32], strides = [1, 1]} : vector<16x64xf32> to vector<16x32xf32>
    %34 = vector.extract_strided_slice %22 {offsets = [0, 64], sizes = [16, 32], strides = [1, 1]} : vector<16x96xf32> to vector<16x32xf32>
    %35 = arith.addf %34, %7 : vector<16x32xf32>
    %36 = vector.extract_strided_slice %18 {offsets = [0, 64], sizes = [16, 32], strides = [1, 1]} : vector<16x96xf32> to vector<16x32xf32>
    %37 = arith.addf %36, %10 : vector<16x32xf32>
    %38 = arith.mulf %32, %37 : vector<16x32xf32>
    %39 = arith.addf %35, %38 : vector<16x32xf32>
    %40 = math.tanh %39 : vector<16x32xf32>
    %cst_19 = arith.constant 1.000000e+00 : f32
    %41 = vector.broadcast %cst_19 : f32 to vector<16x32xf32>
    %42 = arith.subf %41, %33 : vector<16x32xf32>
    %43 = arith.mulf %42, %40 : vector<16x32xf32>
    %44 = arith.mulf %33, %12 : vector<16x32xf32>
    %45 = arith.addf %43, %44 : vector<16x32xf32>
    %46 = arith.truncf %45 : vector<16x32xf32> to vector<16x32xbf16>
    %c1 = arith.constant 1 : index
    %c0_20 = arith.constant 0 : index
    %c0_21 = arith.constant 0 : index
    %47 = vector.load %arg2[%c1, %c0_20, %c0_21] : memref<3x32x128xbf16, #tpu.memory_space<vmem>>, vector<1x32x128xbf16>
    %48 = vector.shape_cast %47 : vector<1x32x128xbf16> to vector<32x128xbf16>
    %cst_22 = arith.constant dense<0.000000e+00> : vector<16x128xf32>
    %49 = tpu.matmul %46, %48, %cst_22 {dimension_numbers = #tpu.dot_dimension_numbers<[1], [0], [0], [1], [0, 0, 1, 1], [], []>} : vector<16x32xbf16>, vector<32x128xbf16>, vector<16x128xf32> -> vector<16x128xf32>
    %50 = vector.extract_strided_slice %49 {offsets = [0, 0], sizes = [16, 32], strides = [1, 1]} : vector<16x128xf32> to vector<16x32xf32>
    %51 = vector.extract_strided_slice %49 {offsets = [0, 32], sizes = [16, 96], strides = [1, 1]} : vector<16x128xf32> to vector<16x96xf32>
    %52 = arith.truncf %50 : vector<16x32xf32> to vector<16x32xbf16>
    %cst_23 = arith.constant dense<0.000000e+00> : vector<16x32xf32>
    %53 = tpu.matmul %0, %52, %cst_23 {dimension_numbers = #tpu.dot_dimension_numbers<[1], [0], [0], [1], [0, 0, 1, 1], [], []>} : vector<16x16xbf16>, vector<16x32xbf16>, vector<16x32xf32> -> vector<16x32xf32>
    %54 = arith.truncf %53 : vector<16x32xf32> to vector<16x32xbf16>
    %cst_24 = arith.constant dense<0.000000e+00> : vector<16x96xf32>
    %55 = tpu.matmul %54, %1, %cst_24 {dimension_numbers = #tpu.dot_dimension_numbers<[1], [0], [0], [1], [0, 0, 1, 1], [], []>} : vector<16x32xbf16>, vector<32x96xbf16>, vector<16x96xf32> -> vector<16x96xf32>
    %56 = vector.extract_strided_slice %55 {offsets = [0, 0], sizes = [16, 64], strides = [1, 1]} : vector<16x96xf32> to vector<16x64xf32>
    %57 = vector.extract_strided_slice %51 {offsets = [0, 0], sizes = [16, 64], strides = [1, 1]} : vector<16x96xf32> to vector<16x64xf32>
    %58 = arith.addf %56, %57 : vector<16x64xf32>
    %59 = arith.addf %58, %4 : vector<16x64xf32>
    %60 = arith.negf %59 : vector<16x64xf32>
    %61 = math.exp %60 : vector<16x64xf32>
    %cst_25 = arith.constant 1.000000e+00 : f32
    %62 = vector.broadcast %cst_25 : f32 to vector<16x64xf32>
    %63 = arith.addf %62, %61 : vector<16x64xf32>
    %64 = arith.divf %62, %63 : vector<16x64xf32>
    %65 = vector.extract_strided_slice %64 {offsets = [0, 0], sizes = [16, 32], strides = [1, 1]} : vector<16x64xf32> to vector<16x32xf32>
    %66 = vector.extract_strided_slice %64 {offsets = [0, 32], sizes = [16, 32], strides = [1, 1]} : vector<16x64xf32> to vector<16x32xf32>
    %67 = vector.extract_strided_slice %55 {offsets = [0, 64], sizes = [16, 32], strides = [1, 1]} : vector<16x96xf32> to vector<16x32xf32>
    %68 = arith.addf %67, %7 : vector<16x32xf32>
    %69 = vector.extract_strided_slice %51 {offsets = [0, 64], sizes = [16, 32], strides = [1, 1]} : vector<16x96xf32> to vector<16x32xf32>
    %70 = arith.addf %69, %10 : vector<16x32xf32>
    %71 = arith.mulf %65, %70 : vector<16x32xf32>
    %72 = arith.addf %68, %71 : vector<16x32xf32>
    %73 = math.tanh %72 : vector<16x32xf32>
    %cst_26 = arith.constant 1.000000e+00 : f32
    %74 = vector.broadcast %cst_26 : f32 to vector<16x32xf32>
    %75 = arith.subf %74, %66 : vector<16x32xf32>
    %76 = arith.mulf %75, %73 : vector<16x32xf32>
    %77 = arith.mulf %66, %45 : vector<16x32xf32>
    %78 = arith.addf %76, %77 : vector<16x32xf32>
    %79 = arith.truncf %78 : vector<16x32xf32> to vector<16x32xbf16>
    %c2 = arith.constant 2 : index
    %c0_27 = arith.constant 0 : index
    %c0_28 = arith.constant 0 : index
    %80 = vector.load %arg2[%c2, %c0_27, %c0_28] : memref<3x32x128xbf16, #tpu.memory_space<vmem>>, vector<1x32x128xbf16>
    %81 = vector.shape_cast %80 : vector<1x32x128xbf16> to vector<32x128xbf16>
    %cst_29 = arith.constant dense<0.000000e+00> : vector<16x128xf32>
    %82 = tpu.matmul %79, %81, %cst_29 {dimension_numbers = #tpu.dot_dimension_numbers<[1], [0], [0], [1], [0, 0, 1, 1], [], []>} : vector<16x32xbf16>, vector<32x128xbf16>, vector<16x128xf32> -> vector<16x128xf32>
    %83 = vector.extract_strided_slice %82 {offsets = [0, 0], sizes = [16, 32], strides = [1, 1]} : vector<16x128xf32> to vector<16x32xf32>
    %84 = vector.extract_strided_slice %82 {offsets = [0, 32], sizes = [16, 96], strides = [1, 1]} : vector<16x128xf32> to vector<16x96xf32>
    %85 = arith.truncf %83 : vector<16x32xf32> to vector<16x32xbf16>
    %cst_30 = arith.constant dense<0.000000e+00> : vector<16x32xf32>
    %86 = tpu.matmul %0, %85, %cst_30 {dimension_numbers = #tpu.dot_dimension_numbers<[1], [0], [0], [1], [0, 0, 1, 1], [], []>} : vector<16x16xbf16>, vector<16x32xbf16>, vector<16x32xf32> -> vector<16x32xf32>
    %87 = arith.truncf %86 : vector<16x32xf32> to vector<16x32xbf16>
    %cst_31 = arith.constant dense<0.000000e+00> : vector<16x96xf32>
    %88 = tpu.matmul %87, %1, %cst_31 {dimension_numbers = #tpu.dot_dimension_numbers<[1], [0], [0], [1], [0, 0, 1, 1], [], []>} : vector<16x32xbf16>, vector<32x96xbf16>, vector<16x96xf32> -> vector<16x96xf32>
    %89 = vector.extract_strided_slice %88 {offsets = [0, 0], sizes = [16, 64], strides = [1, 1]} : vector<16x96xf32> to vector<16x64xf32>
    %90 = vector.extract_strided_slice %84 {offsets = [0, 0], sizes = [16, 64], strides = [1, 1]} : vector<16x96xf32> to vector<16x64xf32>
    %91 = arith.addf %89, %90 : vector<16x64xf32>
    %92 = arith.addf %91, %4 : vector<16x64xf32>
    %93 = arith.negf %92 : vector<16x64xf32>
    %94 = math.exp %93 : vector<16x64xf32>
    %cst_32 = arith.constant 1.000000e+00 : f32
    %95 = vector.broadcast %cst_32 : f32 to vector<16x64xf32>
    %96 = arith.addf %95, %94 : vector<16x64xf32>
    %97 = arith.divf %95, %96 : vector<16x64xf32>
    %98 = vector.extract_strided_slice %97 {offsets = [0, 0], sizes = [16, 32], strides = [1, 1]} : vector<16x64xf32> to vector<16x32xf32>
    %99 = vector.extract_strided_slice %97 {offsets = [0, 32], sizes = [16, 32], strides = [1, 1]} : vector<16x64xf32> to vector<16x32xf32>
    %100 = vector.extract_strided_slice %88 {offsets = [0, 64], sizes = [16, 32], strides = [1, 1]} : vector<16x96xf32> to vector<16x32xf32>
    %101 = arith.addf %100, %7 : vector<16x32xf32>
    %102 = vector.extract_strided_slice %84 {offsets = [0, 64], sizes = [16, 32], strides = [1, 1]} : vector<16x96xf32> to vector<16x32xf32>
    %103 = arith.addf %102, %10 : vector<16x32xf32>
    %104 = arith.mulf %98, %103 : vector<16x32xf32>
    %105 = arith.addf %101, %104 : vector<16x32xf32>
    %106 = math.tanh %105 : vector<16x32xf32>
    %cst_33 = arith.constant 1.000000e+00 : f32
    %107 = vector.broadcast %cst_33 : f32 to vector<16x32xf32>
    %108 = arith.subf %107, %99 : vector<16x32xf32>
    %109 = arith.mulf %108, %106 : vector<16x32xf32>
    %110 = arith.mulf %99, %78 : vector<16x32xf32>
    %111 = arith.addf %109, %110 : vector<16x32xf32>
    %112 = vector.broadcast %11 : vector<1x32xf32> to vector<16x32xf32>
    %113 = arith.mulf %111, %112 : vector<16x32xf32>
    %cst_34 = arith.constant dense<0.000000e+00> : vector<16xf32>
    %114 = vector.multi_reduction <add>, %113, %cst_34 [1] : vector<16x32xf32> to vector<16xf32>
    %115 = vector.shape_cast %114 : vector<16xf32> to vector<16x1xf32>
    %c0_35 = arith.constant 0 : index
    %c0_36 = arith.constant 0 : index
    %116 = memref.load %arg8[%c0_35, %c0_36] : memref<1x1xf32, #tpu.memory_space<smem>>
    %117 = vector.broadcast %116 : f32 to vector<16x1xf32>
    %118 = arith.addf %115, %117 : vector<16x1xf32>
    %cst_37 = arith.constant 0.00999999977 : f32
    %cst_38 = arith.constant 1.000000e+00 : f32
    %119 = vector.broadcast %cst_37 : f32 to vector<16x1xf32>
    %120 = arith.maximumf %119, %118 : vector<16x1xf32>
    %121 = vector.broadcast %cst_38 : f32 to vector<16x1xf32>
    %122 = arith.minimumf %121, %120 : vector<16x1xf32>
    %123 = vector.shape_cast %122 : vector<16x1xf32> to vector<16x1xf32>
    %124 = vector.broadcast %123 : vector<16x1xf32> to vector<16x128xf32>
    %c0_39 = arith.constant 0 : index
    %c0_40 = arith.constant 0 : index
    %125 = vector.load %arg9[%c0_39, %c0_40] : memref<16x128xf32, #tpu.memory_space<vmem>>, vector<16x128xf32>
    tpu.vector_store %arg9[%c0_39, %c0_40], %124 {strides = array<i32>} : memref<16x128xf32, #tpu.memory_space<vmem>>, vector<16x128xf32>,
    return
  }
}

</mosaic_0001>

<llo_original>
// kernel: tpu_custom_call.1
$region0: #{tpu_custom_call.1}
  #allocation0 [shape = 'u32[]', space=smem, size = 0x4, offset = 0x4, fixed_abs, tag = 'smem constant byte address 0x4 - core index']
  #allocation1 [shape = 'u32[144,128]{1,0:T(1,128)}', space=vmem, size = 0x12000, scoped, tag = 'internal scratch']
  #allocation2 [shape = 'f32[1,1]{1,0:T(1,128)S(6)}', space=smem, size = 0x200, scoped, tag = 'scoped memory for tpu_custom_call.1']
  %s0 = inlined_call_operand.hbm [shape: f32[16,32], index: 0, kind: input, shape index: {}]
  %s1 = inlined_call_operand.hbm [shape: bf16[16,16], index: 1, kind: input, shape index: {}]
  %s2 = inlined_call_operand.hbm [shape: bf16[3,32,128], index: 2, kind: input, shape index: {}]
  %s3 = inlined_call_operand.hbm [shape: bf16[32,96], index: 3, kind: input, shape index: {}]
  %s4 = inlined_call_operand.vmem [shape: f32[1,64], index: 4, kind: input, shape index: {}]
  %s5 = inlined_call_operand.vmem [shape: f32[1,32], index: 5, kind: input, shape index: {}]
  %s6 = inlined_call_operand.vmem [shape: f32[1,32], index: 6, kind: input, shape index: {}]
  %s7 = inlined_call_operand.vmem [shape: f32[1,32], index: 7, kind: input, shape index: {}]
  %s8 = inlined_call_operand.<no memory space> [shape: f32[1,1], index: 8, kind: input, shape index: {}]
  %s9 = inlined_call_operand.hbm [shape: f32[16,128], index: 9, kind: output, shape index: {}]
  %s10 = sld [smem:[#allocation0]]
  $region62: #{tpu_custom_call.1} parent=0
    _
  %s12 = ssub.s32 1, %s10
  %s13 = scalar_select 0, %s12, %s10
  %14 = sst [smem:[#allocation2]] %s8
  $region1: #{tpu_custom_call.1} parent=0
    #allocation3 [shape = 'u8[8192]{0}', space=vmem, size = 0x2000, scoped, tag = 'input window, operand 0, single buffered']
    #allocation4 [shape = 's32[1]{0}', space=sflag, size = 0x4, scoped, tag = 'scoped memory for tpu_custom_call.1']
    #allocation5 [shape = 's32[1]{0}', space=sflag, size = 0x4, scoped, tag = 'scoped memory for tpu_custom_call.1']
    #allocation6 [shape = 'u8[4096]{0}', space=vmem, size = 0x1000, scoped, tag = 'input window, operand 1, single buffered']
    #allocation7 [shape = 's32[1]{0}', space=sflag, size = 0x4, scoped, tag = 'scoped memory for tpu_custom_call.1']
    #allocation8 [shape = 'u8[24576]{0}', space=vmem, size = 0x6000, scoped, tag = 'input window, operand 2, single buffered']
    #allocation9 [shape = 'u8[8192]{0}', space=vmem, size = 0x2000, scoped, tag = 'input window, operand 3, single buffered']
    #allocation10 [shape = 's32[1]{0}', space=sflag, size = 0x4, scoped, tag = 'scoped memory for tpu_custom_call.1']
    #allocation11 [shape = 'u8[8192]{0}', space=vmem, size = 0x2000, scoped, tag = 'output window, operand 0, single buffered']
    %15 = vsyncpa [#allocation4], 0
    %16 = vsyncpa [#allocation7], 0
    %17 = vsyncpa [#allocation10], 0
    %18 = vsyncpa [#allocation5], 0
    // Predicated region
    $region2: #{tpu_custom_call.1} parent=1 // pred_check
      _
    $region3: #{tpu_custom_call.1} parent=1 // pred_check_branch
      %20 = sbr.rel (0) target = $region5
    $region4: #{tpu_custom_call.1} parent=1 // pred_region
      %s22 = ssub.s32 256, 256
      %23 = vsyncadd [#allocation4], %s22
      %s24 = sshll.u32 [#allocation3], 4
      %s25 = int_to_ptr.vmem [resolvable:$true] %s24
      %30 = dma.hbm_to_vmem [thread:$0]  %s0, 256, %s25, [#allocation4], 128, 128, 8
    $region5: #{tpu_custom_call.1} parent=1 // pred_fallthru
      _
    // Predicated region
    $region6: #{tpu_custom_call.1} parent=1 // pred_check
      _
    $region7: #{tpu_custom_call.1} parent=1 // pred_check_branch
      %32 = sbr.rel (0) target = $region9
    $region8: #{tpu_custom_call.1} parent=1 // pred_region
      %s34 = ssub.s32 128, 128
      %35 = vsyncadd [#allocation7], %s34
      %s36 = sshll.u32 [#allocation6], 4
      %s37 = int_to_ptr.vmem [resolvable:$true] %s36
      %42 = dma.hbm_to_vmem [thread:$0]  %s1, 128, %s37, [#allocation7], 64, 64, 4
    $region9: #{tpu_custom_call.1} parent=1 // pred_fallthru
      _
    // Predicated region
    $region10: #{tpu_custom_call.1} parent=1 // pred_check
      _
    $region11: #{tpu_custom_call.1} parent=1 // pred_check_branch
      %44 = sbr.rel (0) target = $region13
    $region12: #{tpu_custom_call.1} parent=1 // pred_region
      %s46 = ssub.s32 768, 768
      %47 = vsyncadd [#allocation7], %s46
      %s48 = sshll.u32 [#allocation8], 4
      %s49 = int_to_ptr.vmem [resolvable:$true] %s48
      %54 = dma.hbm_to_vmem [thread:$0]  %s2, 768, %s49, [#allocation7], 64, 64, 4
    $region13: #{tpu_custom_call.1} parent=1 // pred_fallthru
      _
    // Predicated region
    $region14: #{tpu_custom_call.1} parent=1 // pred_check
      _
    $region15: #{tpu_custom_call.1} parent=1 // pred_check_branch
      %56 = sbr.rel (0) target = $region17
    $region16: #{tpu_custom_call.1} parent=1 // pred_region
      %s58 = ssub.s32 256, 256
      %59 = vsyncadd [#allocation10], %s58
      %s60 = sshll.u32 [#allocation9], 4
      %s61 = int_to_ptr.vmem [resolvable:$true] %s60
      %66 = dma.hbm_to_vmem [thread:$0]  %s3, 256, %s61, [#allocation10], 64, 64, 4
    $region17: #{tpu_custom_call.1} parent=1 // pred_fallthru
      _
    // Predicated region
    $region18: #{tpu_custom_call.1} parent=1 // pred_check
      _
    $region19: #{tpu_custom_call.1} parent=1 // pred_check_branch
      %68 = sbr.rel (0) target = $region21
    $region20: #{tpu_custom_call.1} parent=1 // pred_region
      _
    $region21: #{tpu_custom_call.1} parent=1 // pred_fallthru
      _
    // Predicated region
    $region22: #{tpu_custom_call.1} parent=1 // pred_check
      _
    $region23: #{tpu_custom_call.1} parent=1 // pred_check_branch
      %70 = sbr.rel (0) target = $region25
    $region24: #{tpu_custom_call.1} parent=1 // pred_region
      _
    $region25: #{tpu_custom_call.1} parent=1 // pred_fallthru
      _
    // Predicated region
    $region26: #{tpu_custom_call.1} parent=1 // pred_check
      _
    $region27: #{tpu_custom_call.1} parent=1 // pred_check_branch
      %72 = sbr.rel (0) target = $region29
    $region28: #{tpu_custom_call.1} parent=1 // pred_region
      _
    $region29: #{tpu_custom_call.1} parent=1 // pred_fallthru
      _
    // Predicated region
    $region30: #{tpu_custom_call.1} parent=1 // pred_check
      _
    $region31: #{tpu_custom_call.1} parent=1 // pred_check_branch
      %74 = sbr.rel (0) target = $region33
    $region32: #{tpu_custom_call.1} parent=1 // pred_region
      _
    $region33: #{tpu_custom_call.1} parent=1 // pred_fallthru
      _
    // Predicated region
    $region34: #{tpu_custom_call.1} parent=1 // pred_check
      _
    $region35: #{tpu_custom_call.1} parent=1 // pred_check_branch
      %76 = sbr.rel (0) target = $region37
    $region36: #{tpu_custom_call.1} parent=1 // pred_region
      _
    $region37: #{tpu_custom_call.1} parent=1 // pred_fallthru
      _
    // Predicated region
    $region38: #{tpu_custom_call.1} parent=1 // pred_check
      _
    $region39: #{tpu_custom_call.1} parent=1 // pred_check_branch
      %78 = sbr.rel (0) target = $region41
    $region40: #{tpu_custom_call.1} parent=1 // pred_region
      %79 = dma.done [#allocation4], 256
    $region41: #{tpu_custom_call.1} parent=1 // pred_fallthru
      _
    // Predicated region
    $region42: #{tpu_custom_call.1} parent=1 // pred_check
      _
    $region43: #{tpu_custom_call.1} parent=1 // pred_check_branch
      %81 = sbr.rel (0) target = $region45
    $region44: #{tpu_custom_call.1} parent=1 // pred_region
      %82 = dma.done [#allocation7], 128
    $region45: #{tpu_custom_call.1} parent=1 // pred_fallthru
      _
    // Predicated region
    $region46: #{tpu_custom_call.1} parent=1 // pred_check
      _
    $region47: #{tpu_custom_call.1} parent=1 // pred_check_branch
      %84 = sbr.rel (0) target = $region49
    $region48: #{tpu_custom_call.1} parent=1 // pred_region
      %85 = dma.done [#allocation7], 768
    $region49: #{tpu_custom_call.1} parent=1 // pred_fallthru
      _
    // Predicated region
    $region50: #{tpu_custom_call.1} parent=1 // pred_check
      _
    $region51: #{tpu_custom_call.1} parent=1 // pred_check_branch
      %87 = sbr.rel (0) target = $region53
    $region52: #{tpu_custom_call.1} parent=1 // pred_region
      %88 = dma.done [#allocation10], 256
    $region53: #{tpu_custom_call.1} parent=1 // pred_fallthru
      _
    %v90 = vld [vmem:[#allocation6] sm:$0xf]
    %v91 = vld [vmem:[#allocation6 + $0x4] sm:$0xf]
    %v92 = vld [vmem:[#allocation9] sm:$0xf]
    %v93 = vld [vmem:[#allocation9 + $0x4] sm:$0xf]
    %v94 = vld [vmem:[#allocation9 + $0x8] sm:$0xf]
    %v95 = vld [vmem:[#allocation9 + $0xc] sm:$0xf]
    %v96 = vld [vmem:[%s4] sm:$0x1]
    %v98 = vlaneseq
    %v99 = vshrl.u32 %v98, 7
    %v100 = vsub.s32 0, %v99
    %v101 = vrot.slane %v96, %v100
    %v103 = vld [vmem:[%s5] sm:$0x1]
    %v105 = vlaneseq
    %v106 = vshrl.u32 %v105, 7
    %v107 = vsub.s32 0, %v106
    %v108 = vrot.slane %v103, %v107
    %v109 = vld [vmem:[%s6] sm:$0x1]
    %v111 = vlaneseq
    %v112 = vshrl.u32 %v111, 7
    %v113 = vsub.s32 0, %v112
    %v114 = vrot.slane %v109, %v113
    %v115 = vld [vmem:[%s7] sm:$0x1]
    %v116 = vld [vmem:[#allocation3] sm:$0xff]
    %v117 = vld [vmem:[#allocation3 + $0x8] sm:$0xff]
    %v118 = vpack.c.bf16 %v117, %v116
    %v119 = vld [vmem:[#allocation8] sm:$0xf]
    %v120 = vld [vmem:[#allocation8 + $0x4] sm:$0xf]
    %v121 = vld [vmem:[#allocation8 + $0x8] sm:$0xf]
    %v122 = vld [vmem:[#allocation8 + $0xc] sm:$0xf]
    %v127 = vunpack.c.l.b16 %v119
    %v128 = vunpack.c.l.b16 %v120
    %v129 = vunpack.c.l.b16 %v121
    %v130 = vunpack.c.l.b16 %v122
    %v131 = vpack.c.b16 %v128, %v127
    %v132 = vpack.c.b16 %v130, %v129
    %vm135 = vcmask 261120
    %v137 = vsel %vm135, %v118, 0
    %139 = vmatprep.subr.bf16.mxu0 0
    %140 = vmatpush1.bf16.msra.mxu0 0
    %141 = vmatprep.subr.bf16.mxu0 0
    %142 = vmatpush1.bf16.msra.mxu0 0
    %143 = vmatprep.subr.bf16.mxu0 0
    %144 = vmatpush1.bf16.msra.mxu0 0
    %145 = vmatprep.subr.bf16.mxu0 0
    %146 = vmatpush1.bf16.msra.mxu0 0
    %147 = vmatprep.subr.bf16.mxu0 0
    %148 = vmatpush1.bf16.msra.mxu0 0
    %149 = vmatprep.subr.bf16.mxu0 0
    %150 = vmatpush1.bf16.msra.mxu0 0
    %151 = vmatprep.subr.bf16.mxu0 0
    %152 = vmatpush1.bf16.msra.mxu0 %v132
    %153 = vmatprep.subr.bf16.mxu0 0
    %154 = vmatpush1.bf16.msra.mxu0 %v131
    %155 = vmatprep.subr.bf16.mxu0 0
    %156 = vmatpush2.bf16.msra.mxu0 0
    %157 = vmatprep.subr.bf16.mxu0 0
    %158 = vmatpush2.bf16.msra.mxu0 0
    %159 = vmatprep.subr.bf16.mxu0 0
    %160 = vmatpush2.bf16.msra.mxu0 0
    %161 = vmatprep.subr.bf16.mxu0 0
    %162 = vmatpush2.bf16.msra.mxu0 0
    %163 = vmatprep.subr.bf16.mxu0 0
    %164 = vmatpush2.bf16.msra.mxu0 0
    %165 = vmatprep.subr.bf16.mxu0 0
    %166 = vmatpush2.bf16.msra.mxu0 0
    %167 = vmatprep.subr.bf16.mxu0 0
    %168 = vmatpush2.bf16.msra.mxu0 0
    %169 = vmatprep.subr.bf16.mxu0 0
    %170 = vmatpush2.bf16.msra.mxu0 0
    %171 = vmatprep.mubr.bf16.mxu0 0
    %172 = vmatmul.mubr.bf16.gmra.mxu0 %v137
    %v173 = vpop.f32.mrf.mxu0
    %v174 = vadd.f32 0.0, %v173
    %v175 = vpop.f32.mrf.mxu0
    %v176 = vpop.f32.mrf.mxu0
    %v177 = vadd.f32 0.0, %v176
    %v178 = vpop.f32.mrf.mxu0
    %179 = vdwg.mxu0
    %v180 = vpack.c.bf16 %v177, %v174
    %v183 = vunpack.c.l.b16 %v90
    %v184 = vunpack.c.l.b16 %v91
    %v185 = vpack.c.b16 %v184, %v183
    %vm186 = vcmask 130048
    %v188 = vsel %vm186, %v185, 0
    %190 = vmatprep.subr.bf16.mxu0 0
    %191 = vmatpush1.bf16.msra.mxu0 0
    %192 = vmatprep.subr.bf16.mxu0 0
    %193 = vmatpush1.bf16.msra.mxu0 0
    %194 = vmatprep.subr.bf16.mxu0 0
    %195 = vmatpush1.bf16.msra.mxu0 0
    %196 = vmatprep.subr.bf16.mxu0 0
    %197 = vmatpush1.bf16.msra.mxu0 0
    %198 = vmatprep.subr.bf16.mxu0 0
    %199 = vmatpush1.bf16.msra.mxu0 0
    %200 = vmatprep.subr.bf16.mxu0 0
    %201 = vmatpush1.bf16.msra.mxu0 0
    %202 = vmatprep.subr.bf16.mxu0 0
    %203 = vmatpush1.bf16.msra.mxu0 0
    %204 = vmatprep.subr.bf16.mxu0 0
    %205 = vmatpush1.bf16.msra.mxu0 %v180
    %206 = vmatprep.subr.bf16.mxu0 0
    %207 = vmatpush2.bf16.msra.mxu0 0
    %208 = vmatprep.subr.bf16.mxu0 0
    %209 = vmatpush2.bf16.msra.mxu0 0
    %210 = vmatprep.subr.bf16.mxu0 0
    %211 = vmatpush2.bf16.msra.mxu0 0
    %212 = vmatprep.subr.bf16.mxu0 0
    %213 = vmatpush2.bf16.msra.mxu0 0
    %214 = vmatprep.subr.bf16.mxu0 0
    %215 = vmatpush2.bf16.msra.mxu0 0
    %216 = vmatprep.subr.bf16.mxu0 0
    %217 = vmatpush2.bf16.msra.mxu0 0
    %218 = vmatprep.subr.bf16.mxu0 0
    %219 = vmatpush2.bf16.msra.mxu0 0
    %220 = vmatprep.subr.bf16.mxu0 0
    %221 = vmatpush2.bf16.msra.mxu0 0
    %222 = vmatprep.mubr.bf16.mxu0 0
    %223 = vmatmul.mubr.bf16.gmra.mxu0 %v188
    %v224 = vpop.f32.mrf.mxu0
    %v225 = vadd.f32 0.0, %v224
    %v226 = vpop.f32.mrf.mxu0
    %v227 = vpop.f32.mrf.mxu0
    %v228 = vadd.f32 0.0, %v227
    %v229 = vpop.f32.mrf.mxu0
    %230 = vdwg.mxu0
    %v231 = vpack.c.bf16 %v228, %v225
    %v236 = vunpack.c.l.b16 %v92
    %v237 = vunpack.c.l.b16 %v93
    %v238 = vunpack.c.l.b16 %v94
    %v239 = vunpack.c.l.b16 %v95
    %v240 = vpack.c.b16 %v237, %v236
    %v241 = vpack.c.b16 %v239, %v238
    %v245 = vsel %vm135, %v231, 0
    %247 = vmatprep.subr.bf16.mxu0 0
    %248 = vmatpush1.bf16.msra.mxu0 0
    %249 = vmatprep.subr.bf16.mxu0 0
    %250 = vmatpush1.bf16.msra.mxu0 0
    %251 = vmatprep.subr.bf16.mxu0 0
    %252 = vmatpush1.bf16.msra.mxu0 0
    %253 = vmatprep.subr.bf16.mxu0 0
    %254 = vmatpush1.bf16.msra.mxu0 0
    %255 = vmatprep.subr.bf16.mxu0 0
    %256 = vmatpush1.bf16.msra.mxu0 0
    %257 = vmatprep.subr.bf16.mxu0 0
    %258 = vmatpush1.bf16.msra.mxu0 0
    %259 = vmatprep.subr.bf16.mxu0 0
    %260 = vmatpush1.bf16.msra.mxu0 %v241
    %261 = vmatprep.subr.bf16.mxu0 0
    %262 = vmatpush1.bf16.msra.mxu0 %v240
    %263 = vmatprep.subr.bf16.mxu0 0
    %264 = vmatpush2.bf16.msra.mxu0 0
    %265 = vmatprep.subr.bf16.mxu0 0
    %266 = vmatpush2.bf16.msra.mxu0 0
    %267 = vmatprep.subr.bf16.mxu0 0
    %268 = vmatpush2.bf16.msra.mxu0 0
    %269 = vmatprep.subr.bf16.mxu0 0
    %270 = vmatpush2.bf16.msra.mxu0 0
    %271 = vmatprep.subr.bf16.mxu0 0
    %272 = vmatpush2.bf16.msra.mxu0 0
    %273 = vmatprep.subr.bf16.mxu0 0
    %274 = vmatpush2.bf16.msra.mxu0 0
    %275 = vmatprep.subr.bf16.mxu0 0
    %276 = vmatpush2.bf16.msra.mxu0 0
    %277 = vmatprep.subr.bf16.mxu0 0
    %278 = vmatpush2.bf16.msra.mxu0 0
    %279 = vmatprep.mubr.bf16.mxu0 0
    %280 = vmatmul.mubr.bf16.gmra.mxu0 %v245
    %v281 = vpop.f32.mrf.mxu0
    %v282 = vadd.f32 0.0, %v281
    %v283 = vpop.f32.mrf.mxu0
    %v284 = vpop.f32.mrf.mxu0
    %v285 = vadd.f32 0.0, %v284
    %v286 = vpop.f32.mrf.mxu0
    %287 = vdwg.mxu0
    %290 = vrot.lane.b32.xlu0 %v174, 96
    %v291 = vpop.permute.xlu0 %290
    %292 = vrot.lane.b32.xlu0 %v177, 96
    %v293 = vpop.permute.xlu0 %292
    %v296 = vadd.f32 %v282, %v291
    %v297 = vadd.f32 %v285, %v293
    %v298 = vadd.f32 %v296, %v101
    %v299 = vadd.f32 %v297, %v101
    %v300 = vxor.u32 %v298, 2147483648
    %v301 = vxor.u32 %v299, 2147483648
    %v302 = vmul.f32 %v300, 1.442695
    %v303 = vpow.pop %v302
    %v304 = vmul.f32 %v301, 1.442695
    %v305 = vpow.pop %v304
    %v306 = vadd.f32 %v303, 1.0
    %v307 = vadd.f32 %v305, 1.0
    %v308 = vrcp.pop %v306
    %v309 = vmul.f32 1.0, %v308
    %v310 = vrcp.pop %v307
    %v311 = vmul.f32 1.0, %v310
    %312 = vrot.lane.b32.xlu0 %v108, 64
    %v313 = vpop.permute.xlu0 %312
    %v315 = vadd.f32 %v282, %v313
    %v316 = vadd.f32 %v285, %v313
    %317 = vrot.lane.b32.xlu0 %v114, 96
    %v318 = vpop.permute.xlu0 %317
    %v320 = vadd.f32 %v174, %v318
    %v321 = vadd.f32 %v177, %v318
    %324 = vrot.lane.b32.xlu0 %v320, 32
    %v325 = vpop.permute.xlu0 %324
    %326 = vrot.lane.b32.xlu0 %v321, 32
    %v327 = vpop.permute.xlu0 %326
    %v330 = vmul.f32 %v309, %v325
    %v331 = vmul.f32 %v311, %v327
    %334 = vrot.lane.b32.xlu0 %v330, 64
    %v335 = vpop.permute.xlu0 %334
    %336 = vrot.lane.b32.xlu0 %v331, 64
    %v337 = vpop.permute.xlu0 %336
    %v340 = vadd.f32 %v315, %v335
    %v341 = vadd.f32 %v316, %v337
    %v342 = vtanh.pop %v340
    %v343 = vtanh.pop %v341
    %v344 = vsub.f32 1.0, %v309
    %v345 = vsub.f32 1.0, %v311
    %348 = vrot.lane.b32.xlu0 %v342, 96
    %v349 = vpop.permute.xlu0 %348
    %350 = vrot.lane.b32.xlu0 %v343, 96
    %v351 = vpop.permute.xlu0 %350
    %v354 = vmul.f32 %v344, %v349
    %v355 = vmul.f32 %v345, %v351
    %358 = vrot.lane.b32.xlu0 %v116, 32
    %v359 = vpop.permute.xlu0 %358
    %360 = vrot.lane.b32.xlu0 %v117, 32
    %v361 = vpop.permute.xlu0 %360
    %v364 = vmul.f32 %v309, %v359
    %v365 = vmul.f32 %v311, %v361
    %v366 = vadd.f32 %v354, %v364
    %v367 = vadd.f32 %v355, %v365
    %v368 = vpack.c.bf16 %v367, %v366
    %s369 = scalar_lea.vmem [#allocation8], 16
    %v370 = vld [vmem:[%s369] sm:$0xf]
    %v371 = vld [vmem:[%s369 + $0x4] sm:$0xf]
    %v372 = vld [vmem:[%s369 + $0x8] sm:$0xf]
    %v373 = vld [vmem:[%s369 + $0xc] sm:$0xf]
    %375 = vrot.lane.b32.xlu0 %v368, 96
    %v376 = vpop.permute.xlu0 %375
    %v381 = vunpack.c.l.b16 %v370
    %v382 = vunpack.c.l.b16 %v371
    %v383 = vunpack.c.l.b16 %v372
    %v384 = vunpack.c.l.b16 %v373
    %v385 = vpack.c.b16 %v382, %v381
    %v386 = vpack.c.b16 %v384, %v383
    %v390 = vsel %vm135, %v376, 0
    %392 = vmatprep.subr.bf16.mxu0 0
    %393 = vmatpush1.bf16.msra.mxu0 0
    %394 = vmatprep.subr.bf16.mxu0 0
    %395 = vmatpush1.bf16.msra.mxu0 0
    %396 = vmatprep.subr.bf16.mxu0 0
    %397 = vmatpush1.bf16.msra.mxu0 0
    %398 = vmatprep.subr.bf16.mxu0 0
    %399 = vmatpush1.bf16.msra.mxu0 0
    %400 = vmatprep.subr.bf16.mxu0 0
    %401 = vmatpush1.bf16.msra.mxu0 0
    %402 = vmatprep.subr.bf16.mxu0 0
    %403 = vmatpush1.bf16.msra.mxu0 0
    %404 = vmatprep.subr.bf16.mxu0 0
    %405 = vmatpush1.bf16.msra.mxu0 %v386
    %406 = vmatprep.subr.bf16.mxu0 0
    %407 = vmatpush1.bf16.msra.mxu0 %v385
    %408 = vmatprep.subr.bf16.mxu0 0
    %409 = vmatpush2.bf16.msra.mxu0 0
    %410 = vmatprep.subr.bf16.mxu0 0
    %411 = vmatpush2.bf16.msra.mxu0 0
    %412 = vmatprep.subr.bf16.mxu0 0
    %413 = vmatpush2.bf16.msra.mxu0 0
    %414 = vmatprep.subr.bf16.mxu0 0
    %415 = vmatpush2.bf16.msra.mxu0 0
    %416 = vmatprep.subr.bf16.mxu0 0
    %417 = vmatpush2.bf16.msra.mxu0 0
    %418 = vmatprep.subr.bf16.mxu0 0
    %419 = vmatpush2.bf16.msra.mxu0 0
    %420 = vmatprep.subr.bf16.mxu0 0
    %421 = vmatpush2.bf16.msra.mxu0 0
    %422 = vmatprep.subr.bf16.mxu0 0
    %423 = vmatpush2.bf16.msra.mxu0 0
    %424 = vmatprep.mubr.bf16.mxu0 0
    %425 = vmatmul.mubr.bf16.gmra.mxu0 %v390
    %v426 = vpop.f32.mrf.mxu0
    %v427 = vadd.f32 0.0, %v426
    %v428 = vpop.f32.mrf.mxu0
    %v429 = vpop.f32.mrf.mxu0
    %v430 = vadd.f32 0.0, %v429
    %v431 = vpop.f32.mrf.mxu0
    %432 = vdwg.mxu0
    %v433 = vpack.c.bf16 %v430, %v427
    %434 = vmatprep.subr.bf16.mxu0 0
    %435 = vmatpush1.bf16.msra.mxu0 0
    %436 = vmatprep.subr.bf16.mxu0 0
    %437 = vmatpush1.bf16.msra.mxu0 0
    %438 = vmatprep.subr.bf16.mxu0 0
    %439 = vmatpush1.bf16.msra.mxu0 0
    %440 = vmatprep.subr.bf16.mxu0 0
    %441 = vmatpush1.bf16.msra.mxu0 0
    %442 = vmatprep.subr.bf16.mxu0 0
    %443 = vmatpush1.bf16.msra.mxu0 0
    %444 = vmatprep.subr.bf16.mxu0 0
    %445 = vmatpush1.bf16.msra.mxu0 0
    %446 = vmatprep.subr.bf16.mxu0 0
    %447 = vmatpush1.bf16.msra.mxu0 0
    %448 = vmatprep.subr.bf16.mxu0 0
    %449 = vmatpush1.bf16.msra.mxu0 %v433
    %450 = vmatprep.subr.bf16.mxu0 0
    %451 = vmatpush2.bf16.msra.mxu0 0
    %452 = vmatprep.subr.bf16.mxu0 0
    %453 = vmatpush2.bf16.msra.mxu0 0
    %454 = vmatprep.subr.bf16.mxu0 0
    %455 = vmatpush2.bf16.msra.mxu0 0
    %456 = vmatprep.subr.bf16.mxu0 0
    %457 = vmatpush2.bf16.msra.mxu0 0
    %458 = vmatprep.subr.bf16.mxu0 0
    %459 = vmatpush2.bf16.msra.mxu0 0
    %460 = vmatprep.subr.bf16.mxu0 0
    %461 = vmatpush2.bf16.msra.mxu0 0
    %462 = vmatprep.subr.bf16.mxu0 0
    %463 = vmatpush2.bf16.msra.mxu0 0
    %464 = vmatprep.subr.bf16.mxu0 0
    %465 = vmatpush2.bf16.msra.mxu0 0
    %466 = vmatprep.mubr.bf16.mxu0 0
    %467 = vmatmul.mubr.bf16.gmra.mxu0 %v188
    %v468 = vpop.f32.mrf.mxu0
    %v469 = vadd.f32 0.0, %v468
    %v470 = vpop.f32.mrf.mxu0
    %v471 = vpop.f32.mrf.mxu0
    %v472 = vadd.f32 0.0, %v471
    %v473 = vpop.f32.mrf.mxu0
    %474 = vdwg.mxu0
    %v475 = vpack.c.bf16 %v472, %v469
    %v477 = vsel %vm135, %v475, 0
    %479 = vmatprep.subr.bf16.mxu0 0
    %480 = vmatpush1.bf16.msra.mxu0 0
    %481 = vmatprep.subr.bf16.mxu0 0
    %482 = vmatpush1.bf16.msra.mxu0 0
    %483 = vmatprep.subr.bf16.mxu0 0
    %484 = vmatpush1.bf16.msra.mxu0 0
    %485 = vmatprep.subr.bf16.mxu0 0
    %486 = vmatpush1.bf16.msra.mxu0 0
    %487 = vmatprep.subr.bf16.mxu0 0
    %488 = vmatpush1.bf16.msra.mxu0 0
    %489 = vmatprep.subr.bf16.mxu0 0
    %490 = vmatpush1.bf16.msra.mxu0 0
    %491 = vmatprep.subr.bf16.mxu0 0
    %492 = vmatpush1.bf16.msra.mxu0 %v241
    %493 = vmatprep.subr.bf16.mxu0 0
    %494 = vmatpush1.bf16.msra.mxu0 %v240
    %495 = vmatprep.subr.bf16.mxu0 0
    %496 = vmatpush2.bf16.msra.mxu0 0
    %497 = vmatprep.subr.bf16.mxu0 0
    %498 = vmatpush2.bf16.msra.mxu0 0
    %499 = vmatprep.subr.bf16.mxu0 0
    %500 = vmatpush2.bf16.msra.mxu0 0
    %501 = vmatprep.subr.bf16.mxu0 0
    %502 = vmatpush2.bf16.msra.mxu0 0
    %503 = vmatprep.subr.bf16.mxu0 0
    %504 = vmatpush2.bf16.msra.mxu0 0
    %505 = vmatprep.subr.bf16.mxu0 0
    %506 = vmatpush2.bf16.msra.mxu0 0
    %507 = vmatprep.subr.bf16.mxu0 0
    %508 = vmatpush2.bf16.msra.mxu0 0
    %509 = vmatprep.subr.bf16.mxu0 0
    %510 = vmatpush2.bf16.msra.mxu0 0
    %511 = vmatprep.mubr.bf16.mxu0 0
    %512 = vmatmul.mubr.bf16.gmra.mxu0 %v477
    %v513 = vpop.f32.mrf.mxu0
    %v514 = vadd.f32 0.0, %v513
    %v515 = vpop.f32.mrf.mxu0
    %v516 = vpop.f32.mrf.mxu0
    %v517 = vadd.f32 0.0, %v516
    %v518 = vpop.f32.mrf.mxu0
    %519 = vdwg.mxu0
    %522 = vrot.lane.b32.xlu0 %v427, 96
    %v523 = vpop.permute.xlu0 %522
    %524 = vrot.lane.b32.xlu0 %v430, 96
    %v525 = vpop.permute.xlu0 %524
    %v528 = vadd.f32 %v514, %v523
    %v529 = vadd.f32 %v517, %v525
    %v530 = vadd.f32 %v528, %v101
    %v531 = vadd.f32 %v529, %v101
    %v532 = vxor.u32 %v530, 2147483648
    %v533 = vxor.u32 %v531, 2147483648
    %v534 = vmul.f32 %v532, 1.442695
    %v535 = vpow.pop %v534
    %v536 = vmul.f32 %v533, 1.442695
    %v537 = vpow.pop %v536
    %v538 = vadd.f32 %v535, 1.0
    %v539 = vadd.f32 %v537, 1.0
    %v540 = vrcp.pop %v538
    %v541 = vmul.f32 1.0, %v540
    %v542 = vrcp.pop %v539
    %v543 = vmul.f32 1.0, %v542
    %v544 = vadd.f32 %v514, %v313
    %v545 = vadd.f32 %v517, %v313
    %v546 = vadd.f32 %v427, %v318
    %v547 = vadd.f32 %v430, %v318
    %550 = vrot.lane.b32.xlu0 %v546, 32
    %v551 = vpop.permute.xlu0 %550
    %552 = vrot.lane.b32.xlu0 %v547, 32
    %v553 = vpop.permute.xlu0 %552
    %v556 = vmul.f32 %v541, %v551
    %v557 = vmul.f32 %v543, %v553
    %560 = vrot.lane.b32.xlu0 %v556, 64
    %v561 = vpop.permute.xlu0 %560
    %562 = vrot.lane.b32.xlu0 %v557, 64
    %v563 = vpop.permute.xlu0 %562
    %v566 = vadd.f32 %v544, %v561
    %v567 = vadd.f32 %v545, %v563
    %v568 = vtanh.pop %v566
    %v569 = vtanh.pop %v567
    %v570 = vsub.f32 1.0, %v541
    %v571 = vsub.f32 1.0, %v543
    %574 = vrot.lane.b32.xlu0 %v568, 96
    %v575 = vpop.permute.xlu0 %574
    %576 = vrot.lane.b32.xlu0 %v569, 96
    %v577 = vpop.permute.xlu0 %576
    %v580 = vmul.f32 %v570, %v575
    %v581 = vmul.f32 %v571, %v577
    %v582 = vmul.f32 %v541, %v366
    %v583 = vmul.f32 %v543, %v367
    %v584 = vadd.f32 %v580, %v582
    %v585 = vadd.f32 %v581, %v583
    %v586 = vpack.c.bf16 %v585, %v584
    %s587 = scalar_lea.vmem [#allocation8], 32
    %v588 = vld [vmem:[%s587] sm:$0xf]
    %v589 = vld [vmem:[%s587 + $0x4] sm:$0xf]
    %v590 = vld [vmem:[%s587 + $0x8] sm:$0xf]
    %v591 = vld [vmem:[%s587 + $0xc] sm:$0xf]
    %593 = vrot.lane.b32.xlu0 %v586, 96
    %v594 = vpop.permute.xlu0 %593
    %v599 = vunpack.c.l.b16 %v588
    %v600 = vunpack.c.l.b16 %v589
    %v601 = vunpack.c.l.b16 %v590
    %v602 = vunpack.c.l.b16 %v591
    %v603 = vpack.c.b16 %v600, %v599
    %v604 = vpack.c.b16 %v602, %v601
    %v608 = vsel %vm135, %v594, 0
    %610 = vmatprep.subr.bf16.mxu0 0
    %611 = vmatpush1.bf16.msra.mxu0 0
    %612 = vmatprep.subr.bf16.mxu0 0
    %613 = vmatpush1.bf16.msra.mxu0 0
    %614 = vmatprep.subr.bf16.mxu0 0
    %615 = vmatpush1.bf16.msra.mxu0 0
    %616 = vmatprep.subr.bf16.mxu0 0
    %617 = vmatpush1.bf16.msra.mxu0 0
    %618 = vmatprep.subr.bf16.mxu0 0
    %619 = vmatpush1.bf16.msra.mxu0 0
    %620 = vmatprep.subr.bf16.mxu0 0
    %621 = vmatpush1.bf16.msra.mxu0 0
    %622 = vmatprep.subr.bf16.mxu0 0
    %623 = vmatpush1.bf16.msra.mxu0 %v604
    %624 = vmatprep.subr.bf16.mxu0 0
    %625 = vmatpush1.bf16.msra.mxu0 %v603
    %626 = vmatprep.subr.bf16.mxu0 0
    %627 = vmatpush2.bf16.msra.mxu0 0
    %628 = vmatprep.subr.bf16.mxu0 0
    %629 = vmatpush2.bf16.msra.mxu0 0
    %630 = vmatprep.subr.bf16.mxu0 0
    %631 = vmatpush2.bf16.msra.mxu0 0
    %632 = vmatprep.subr.bf16.mxu0 0
    %633 = vmatpush2.bf16.msra.mxu0 0
    %634 = vmatprep.subr.bf16.mxu0 0
    %635 = vmatpush2.bf16.msra.mxu0 0
    %636 = vmatprep.subr.bf16.mxu0 0
    %637 = vmatpush2.bf16.msra.mxu0 0
    %638 = vmatprep.subr.bf16.mxu0 0
    %639 = vmatpush2.bf16.msra.mxu0 0
    %640 = vmatprep.subr.bf16.mxu0 0
    %641 = vmatpush2.bf16.msra.mxu0 0
    %642 = vmatprep.mubr.bf16.mxu0 0
    %643 = vmatmul.mubr.bf16.gmra.mxu0 %v608
    %v644 = vpop.f32.mrf.mxu0
    %v645 = vadd.f32 0.0, %v644
    %v646 = vpop.f32.mrf.mxu0
    %v647 = vpop.f32.mrf.mxu0
    %v648 = vadd.f32 0.0, %v647
    %v649 = vpop.f32.mrf.mxu0
    %650 = vdwg.mxu0
    %v651 = vpack.c.bf16 %v648, %v645
    %652 = vmatprep.subr.bf16.mxu0 0
    %653 = vmatpush1.bf16.msra.mxu0 0
    %654 = vmatprep.subr.bf16.mxu0 0
    %655 = vmatpush1.bf16.msra.mxu0 0
    %656 = vmatprep.subr.bf16.mxu0 0
    %657 = vmatpush1.bf16.msra.mxu0 0
    %658 = vmatprep.subr.bf16.mxu0 0
    %659 = vmatpush1.bf16.msra.mxu0 0
    %660 = vmatprep.subr.bf16.mxu0 0
    %661 = vmatpush1.bf16.msra.mxu0 0
    %662 = vmatprep.subr.bf16.mxu0 0
    %663 = vmatpush1.bf16.msra.mxu0 0
    %664 = vmatprep.subr.bf16.mxu0 0
    %665 = vmatpush1.bf16.msra.mxu0 0
    %666 = vmatprep.subr.bf16.mxu0 0
    %667 = vmatpush1.bf16.msra.mxu0 %v651
    %668 = vmatprep.subr.bf16.mxu0 0
    %669 = vmatpush2.bf16.msra.mxu0 0
    %670 = vmatprep.subr.bf16.mxu0 0
    %671 = vmatpush2.bf16.msra.mxu0 0
    %672 = vmatprep.subr.bf16.mxu0 0
    %673 = vmatpush2.bf16.msra.mxu0 0
    %674 = vmatprep.subr.bf16.mxu0 0
    %675 = vmatpush2.bf16.msra.mxu0 0
    %676 = vmatprep.subr.bf16.mxu0 0
    %677 = vmatpush2.bf16.msra.mxu0 0
    %678 = vmatprep.subr.bf16.mxu0 0
    %679 = vmatpush2.bf16.msra.mxu0 0
    %680 = vmatprep.subr.bf16.mxu0 0
    %681 = vmatpush2.bf16.msra.mxu0 0
    %682 = vmatprep.subr.bf16.mxu0 0
    %683 = vmatpush2.bf16.msra.mxu0 0
    %684 = vmatprep.mubr.bf16.mxu0 0
    %685 = vmatmul.mubr.bf16.gmra.mxu0 %v188
    %v686 = vpop.f32.mrf.mxu0
    %v687 = vadd.f32 0.0, %v686
    %v688 = vpop.f32.mrf.mxu0
    %v689 = vpop.f32.mrf.mxu0
    %v690 = vadd.f32 0.0, %v689
    %v691 = vpop.f32.mrf.mxu0
    %692 = vdwg.mxu0
    %v693 = vpack.c.bf16 %v690, %v687
    %v695 = vsel %vm135, %v693, 0
    %697 = vmatprep.subr.bf16.mxu0 0
    %698 = vmatpush1.bf16.msra.mxu0 0
    %699 = vmatprep.subr.bf16.mxu0 0
    %700 = vmatpush1.bf16.msra.mxu0 0
    %701 = vmatprep.subr.bf16.mxu0 0
    %702 = vmatpush1.bf16.msra.mxu0 0
    %703 = vmatprep.subr.bf16.mxu0 0
    %704 = vmatpush1.bf16.msra.mxu0 0
    %705 = vmatprep.subr.bf16.mxu0 0
    %706 = vmatpush1.bf16.msra.mxu0 0
    %707 = vmatprep.subr.bf16.mxu0 0
    %708 = vmatpush1.bf16.msra.mxu0 0
    %709 = vmatprep.subr.bf16.mxu0 0
    %710 = vmatpush1.bf16.msra.mxu0 %v241
    %711 = vmatprep.subr.bf16.mxu0 0
    %712 = vmatpush1.bf16.msra.mxu0 %v240
    %713 = vmatprep.subr.bf16.mxu0 0
    %714 = vmatpush2.bf16.msra.mxu0 0
    %715 = vmatprep.subr.bf16.mxu0 0
    %716 = vmatpush2.bf16.msra.mxu0 0
    %717 = vmatprep.subr.bf16.mxu0 0
    %718 = vmatpush2.bf16.msra.mxu0 0
    %719 = vmatprep.subr.bf16.mxu0 0
    %720 = vmatpush2.bf16.msra.mxu0 0
    %721 = vmatprep.subr.bf16.mxu0 0
    %722 = vmatpush2.bf16.msra.mxu0 0
    %723 = vmatprep.subr.bf16.mxu0 0
    %724 = vmatpush2.bf16.msra.mxu0 0
    %725 = vmatprep.subr.bf16.mxu0 0
    %726 = vmatpush2.bf16.msra.mxu0 0
    %727 = vmatprep.subr.bf16.mxu0 0
    %728 = vmatpush2.bf16.msra.mxu0 0
    %729 = vmatprep.mubr.bf16.mxu0 0
    %730 = vmatmul.mubr.bf16.gmra.mxu0 %v695
    %v731 = vpop.f32.mrf.mxu0
    %v732 = vadd.f32 0.0, %v731
    %v733 = vpop.f32.mrf.mxu0
    %v734 = vpop.f32.mrf.mxu0
    %v735 = vadd.f32 0.0, %v734
    %v736 = vpop.f32.mrf.mxu0
    %737 = vdwg.mxu0
    %740 = vrot.lane.b32.xlu0 %v645, 96
    %v741 = vpop.permute.xlu0 %740
    %742 = vrot.lane.b32.xlu0 %v648, 96
    %v743 = vpop.permute.xlu0 %742
    %v746 = vadd.f32 %v732, %v741
    %v747 = vadd.f32 %v735, %v743
    %v748 = vadd.f32 %v746, %v101
    %v749 = vadd.f32 %v747, %v101
    %v750 = vxor.u32 %v748, 2147483648
    %v751 = vxor.u32 %v749, 2147483648
    %v752 = vmul.f32 %v750, 1.442695
    %v753 = vpow.pop %v752
    %v754 = vmul.f32 %v751, 1.442695
    %v755 = vpow.pop %v754
    %v756 = vadd.f32 %v753, 1.0
    %v757 = vadd.f32 %v755, 1.0
    %v758 = vrcp.pop %v756
    %v759 = vmul.f32 1.0, %v758
    %v760 = vrcp.pop %v757
    %v761 = vmul.f32 1.0, %v760
    %v762 = vadd.f32 %v732, %v313
    %v763 = vadd.f32 %v735, %v313
    %v764 = vadd.f32 %v645, %v318
    %v765 = vadd.f32 %v648, %v318
    %768 = vrot.lane.b32.xlu0 %v764, 32
    %v769 = vpop.permute.xlu0 %768
    %770 = vrot.lane.b32.xlu0 %v765, 32
    %v771 = vpop.permute.xlu0 %770
    %v774 = vmul.f32 %v759, %v769
    %v775 = vmul.f32 %v761, %v771
    %778 = vrot.lane.b32.xlu0 %v774, 64
    %v779 = vpop.permute.xlu0 %778
    %780 = vrot.lane.b32.xlu0 %v775, 64
    %v781 = vpop.permute.xlu0 %780
    %v784 = vadd.f32 %v762, %v779
    %v785 = vadd.f32 %v763, %v781
    %v786 = vtanh.pop %v784
    %v787 = vtanh.pop %v785
    %v788 = vsub.f32 1.0, %v759
    %v789 = vsub.f32 1.0, %v761
    %792 = vrot.lane.b32.xlu0 %v786, 96
    %v793 = vpop.permute.xlu0 %792
    %794 = vrot.lane.b32.xlu0 %v787, 96
    %v795 = vpop.permute.xlu0 %794
    %v798 = vmul.f32 %v788, %v793
    %v799 = vmul.f32 %v789, %v795
    %v800 = vmul.f32 %v759, %v584
    %v801 = vmul.f32 %v761, %v585
    %v802 = vadd.f32 %v798, %v800
    %v803 = vadd.f32 %v799, %v801
    %v805 = vlaneseq
    %v806 = vshrl.u32 %v805, 7
    %v807 = vsub.s32 0, %v806
    %v808 = vrot.slane %v115, %v807
    %809 = vrot.lane.b32.xlu0 %v808, 32
    %v810 = vpop.permute.xlu0 %809
    %v812 = vmul.f32 %v802, %v810
    %v813 = vmul.f32 %v803, %v810
    %816 = vrot.lane.b32.xlu0 %v812, 96
    %v817 = vpop.permute.xlu0 %816
    %818 = vrot.lane.b32.xlu0 %v813, 96
    %v819 = vpop.permute.xlu0 %818
    %v822 = vsel %vm135, %v817, 0.0
    %823 = vadd.xlane.f32.xlu0 %v822
    %v824 = vpop.xlane.xlu0 %823
    %v825 = vsel %vm135, %v819, 0.0
    %826 = vadd.xlane.f32.xlu0 %v825
    %v827 = vpop.xlane.xlu0 %826
    %s828 = sld [smem:[#allocation2]]
    %v829 = vstv %s828
    %v830 = vadd.f32 %v824, %v829
    %v831 = vadd.f32 %v827, %v829
    %v832 = vmax.f32 %v830, 0.01
    %v833 = vmax.f32 %v831, 0.01
    %v834 = vmin.f32 %v832, 1.0
    %v835 = vmin.f32 %v833, 1.0
    %836 = vst [vmem:[#allocation11] sm:$0xff] %v834
    %837 = vst [vmem:[#allocation11 + $0x8] sm:$0xff] %v835
    // Predicated region
    $region54: #{tpu_custom_call.1} parent=1 // pred_check
      _
    $region55: #{tpu_custom_call.1} parent=1 // pred_check_branch
      %839 = sbr.rel (0) target = $region57
    $region56: #{tpu_custom_call.1} parent=1 // pred_region
      %s841 = ssub.s32 256, 256
      %842 = vsyncadd [#allocation5], %s841
      %s843 = sshll.u32 [#allocation11], 4
      %s844 = int_to_ptr.vmem [resolvable:$true] %s843
      %849 = dma.vmem_to_hbm [thread:$0]  %s844, 256, %s9, [#allocation5], 128, 128, 8
    $region57: #{tpu_custom_call.1} parent=1 // pred_fallthru
      _
    // Predicated region
    $region58: #{tpu_custom_call.1} parent=1 // pred_check
      _
    $region59: #{tpu_custom_call.1} parent=1 // pred_check_branch
      %851 = sbr.rel (0) target = $region61
    $region60: #{tpu_custom_call.1} parent=1 // pred_region
      %852 = dma.done [#allocation5], 256
    $region61: #{tpu_custom_call.1} parent=1 // pred_fallthru
      _
    %853 = vsyncpa [#allocation4], 1
    %854 = vsyncpa [#allocation7], 1
    %855 = vsyncpa [#allocation10], 1
    %856 = vsyncpa [#allocation5], 1

</llo_original>
